<compile_context>
chip_gen: v5e
topology: v5e:2x2
jax: 0.10.0
libtpu: 0.0.40
codegen_flags: <defaults>
</compile_context>

<pallas_src>
import math

import jax
import jax.numpy as jnp
from jax.experimental import pallas as pl
from jax.experimental.pallas import tpu as pltpu


def _actor_kernel(h_ref, w_ref, b_ref, out_ref):
    h = h_ref[...]                                                  # (bB, D)

    # fc: logits = h @ W + b      (MXU matmul, f32 accumulate)
    logits = jnp.dot(h, w_ref[...], preferred_element_type=jnp.float32)
    logits = logits + b_ref[...]                                    # (bB, C)

    # log_softmax along the class dim (numerically stable).
    m = jnp.max(logits, axis=1, keepdims=True)                      # (bB, 1)
    shifted = logits - m
    lse = jnp.log(jnp.sum(jnp.exp(shifted), axis=1, keepdims=True)) # (bB, 1)
    out_ref[...] = shifted - lse                                    # (bB, C)


def actor_forward(h_t, w, b):
    """Actor forward: log_softmax(h_t @ w + b, axis=1) in one Pallas kernel.

    h_t: (B, D) float32
    w:   (D, C) float32   (transposed nn.Linear weight)
    b:   (1, C) float32
    Returns a_t: (B, C) float32 log-probabilities.
    """
    B, D = h_t.shape
    C = w.shape[1]

    # Batch tiling: single block for small B; 256-row blocks (parallel across
    # TensorCores on v7x) when B is large and evenly divisible.
    if B > 256 and B % 256 == 0:
        block_b = 256
    else:
        block_b = B
    grid = (B // block_b,)

    a_t = pl.pallas_call(
        _actor_kernel,
        out_shape=jax.ShapeDtypeStruct((B, C), jnp.float32),
        grid=grid,
        in_specs=[
            pl.BlockSpec((block_b, D), lambda i: (i, 0)),   # activations tile over B
            pl.BlockSpec((D, C), lambda i: (0, 0)),         # weights: full, resident
            pl.BlockSpec((1, C), lambda i: (0, 0)),         # bias: full, resident
        ],
        out_specs=pl.BlockSpec((block_b, C), lambda i: (i, 0)),
        compiler_params=pltpu.CompilerParams(
            dimension_semantics=("parallel",)),
    )(h_t, w, b)

    return a_t


if __name__ == "__main__":
    # Small shapes consistent with the module: batch=2, input_size=32,
    # num_classes=10.
    B, D, C = 2, 32, 10

    key = jax.random.PRNGKey(0)
    k_h, k_w, k_b = jax.random.split(key, 3)

    h_t = jax.random.normal(k_h, (B, D), dtype=jnp.float32)

    # Deterministic parameter init (uniform, PyTorch Linear fan-in scale).
    lim = 1.0 / math.sqrt(D)
    w = jax.random.uniform(k_w, (D, C), minval=-lim, maxval=lim, dtype=jnp.float32)
    b = jax.random.uniform(k_b, (1, C), minval=-lim, maxval=lim, dtype=jnp.float32)

    a_t = actor_forward(h_t, w, b)
    jax.block_until_ready(a_t)

    # Pure-JAX reference check.
    a_ref = jax.nn.log_softmax(h_t @ w + b, axis=1)

    assert a_t.shape == (B, C)
    assert jnp.allclose(a_t, a_ref, atol=1e-5, rtol=1e-5)
    # log-probabilities should sum (in prob space) to 1 per row.
    assert jnp.allclose(jnp.sum(jnp.exp(a_t), axis=1), 1.0, atol=1e-5)

    print("KERNEL_OK")
</pallas_src>

<mosaic_0001>
module attributes {stable_mosaic.version = 11 : i64} {
  func.func @_actor_kernel(%arg0: i32, %arg1: memref<2x32xf32, #tpu.memory_space<vmem>>, %arg2: memref<32x10xf32, #tpu.memory_space<vmem>>, %arg3: memref<1x10xf32, #tpu.memory_space<vmem>>, %arg4: memref<2x10xf32, #tpu.memory_space<vmem>>) attributes {dimension_semantics = [#tpu.dimension_semantics<parallel>], iteration_bounds = array<i64: 1>, scalar_prefetch = 0 : i64, scratch_operands = 0 : i64, tpu.core_type = #tpu.core_type<tc>, window_params = [{transform_indices = @transform_0, window_bounds = array<i64: 2, 32>}, {pipeline_mode = #tpu.pipeline_mode<synchronous>, transform_indices = @transform_1, window_bounds = array<i64: 32, 10>}, {pipeline_mode = #tpu.pipeline_mode<synchronous>, transform_indices = @transform_2, window_bounds = array<i64: 1, 10>}, {transform_indices = @transform_3, window_bounds = array<i64: 2, 10>}]} {
    %c0 = arith.constant 0 : index
    %c0_0 = arith.constant 0 : index
    %0 = vector.load %arg1[%c0, %c0_0] : memref<2x32xf32, #tpu.memory_space<vmem>>, vector<2x32xf32>
    %c0_1 = arith.constant 0 : index
    %c0_2 = arith.constant 0 : index
    %1 = vector.load %arg2[%c0_1, %c0_2] : memref<32x10xf32, #tpu.memory_space<vmem>>, vector<32x10xf32>
    %cst = arith.constant dense<0.000000e+00> : vector<2x10xf32>
    %2 = tpu.matmul %0, %1, %cst {dimension_numbers = #tpu.dot_dimension_numbers<[1], [0], [0], [1], [0, 0, 1, 1], [], []>} : vector<2x32xf32>, vector<32x10xf32>, vector<2x10xf32> -> vector<2x10xf32>
    %c0_3 = arith.constant 0 : index
    %c0_4 = arith.constant 0 : index
    %3 = vector.load %arg3[%c0_3, %c0_4] : memref<1x10xf32, #tpu.memory_space<vmem>>, vector<1x10xf32>
    %4 = vector.broadcast %3 : vector<1x10xf32> to vector<2x10xf32>
    %5 = arith.addf %2, %4 : vector<2x10xf32>
    %cst_5 = arith.constant dense<0xFF800000> : vector<2xf32>
    %6 = vector.multi_reduction <maximumf>, %5, %cst_5 [1] : vector<2x10xf32> to vector<2xf32>
    %7 = vector.shape_cast %6 : vector<2xf32> to vector<2x1xf32>
    %8 = vector.broadcast %7 : vector<2x1xf32> to vector<2x10xf32>
    %9 = arith.subf %5, %8 : vector<2x10xf32>
    %10 = math.exp %9 : vector<2x10xf32>
    %cst_6 = arith.constant dense<0.000000e+00> : vector<2xf32>
    %11 = vector.multi_reduction <add>, %10, %cst_6 [1] : vector<2x10xf32> to vector<2xf32>
    %12 = vector.shape_cast %11 : vector<2xf32> to vector<2x1xf32>
    %13 = math.log %12 : vector<2x1xf32>
    %14 = vector.broadcast %13 : vector<2x1xf32> to vector<2x10xf32>
    %15 = arith.subf %9, %14 : vector<2x10xf32>
    %c0_7 = arith.constant 0 : index
    %c0_8 = arith.constant 0 : index
    %16 = vector.load %arg4[%c0_7, %c0_8] : memref<2x10xf32, #tpu.memory_space<vmem>>, vector<2x10xf32>
    tpu.vector_store %arg4[%c0_7, %c0_8], %15 {strides = array<i32>} : memref<2x10xf32, #tpu.memory_space<vmem>>, vector<2x10xf32>,
    return
  }
  func.func @transform_0(%arg0: i32) -> (i32, i32) {
    %c0_i32 = arith.constant 0 : i32
    %c0_i32_0 = arith.constant 0 : i32
    return %arg0, %c0_i32 : i32, i32
  }
  func.func @transform_1(%arg0: i32) -> (i32, i32) {
    %c0_i32 = arith.constant 0 : i32
    %c0_i32_0 = arith.constant 0 : i32
    %c0_i32_1 = arith.constant 0 : i32
    return %c0_i32, %c0_i32_0 : i32, i32
  }
  func.func @transform_2(%arg0: i32) -> (i32, i32) {
    %c0_i32 = arith.constant 0 : i32
    %c0_i32_0 = arith.constant 0 : i32
    %c0_i32_1 = arith.constant 0 : i32
    return %c0_i32, %c0_i32_0 : i32, i32
  }
  func.func @transform_3(%arg0: i32) -> (i32, i32) {
    %c0_i32 = arith.constant 0 : i32
    %c0_i32_0 = arith.constant 0 : i32
    return %arg0, %c0_i32 : i32, i32
  }
}

</mosaic_0001>

<llo_original>
// kernel: tpu_custom_call.1
$region0: #{tpu_custom_call.1}
  #allocation0 [shape = 'u32[]', space=smem, size = 0x4, offset = 0x4, fixed_abs, tag = 'smem constant byte address 0x4 - core index']
  #allocation1 [shape = 'u32[72,128]{1,0:T(1,128)}', space=vmem, size = 0x9000, scoped, tag = 'internal scratch']
  %s0 = inlined_call_operand.vmem [shape: f32[2,32], index: 0, kind: input, shape index: {}]
  %s1 = inlined_call_operand.vmem [shape: f32[32,10], index: 1, kind: input, shape index: {}]
  %s2 = inlined_call_operand.vmem [shape: f32[1,10], index: 2, kind: input, shape index: {}]
  %s3 = inlined_call_operand.hbm [shape: f32[2,10], index: 3, kind: output, shape index: {}]
  %s4 = sld [smem:[#allocation0]]
  $region22: #{tpu_custom_call.1} parent=0
    _
  %s6 = ssub.s32 1, %s4
  %s7 = scalar_select 0, %s6, %s4
  $region1: #{tpu_custom_call.1} parent=0
    #allocation2 [shape = 'u8[1024]{0}', space=vmem, size = 0x400, scoped, tag = 'output window, operand 0, single buffered']
    #allocation3 [shape = 's32[1]{0}', space=sflag, size = 0x4, scoped, tag = 'scoped memory for tpu_custom_call.1']
    %8 = vsyncpa [#allocation3], 0
    // Predicated region
    $region2: #{tpu_custom_call.1} parent=1 // pred_check
      _
    $region3: #{tpu_custom_call.1} parent=1 // pred_check_branch
      %10 = sbr.rel (0) target = $region5
    $region4: #{tpu_custom_call.1} parent=1 // pred_region
      _
    $region5: #{tpu_custom_call.1} parent=1 // pred_fallthru
      _
    // Predicated region
    $region6: #{tpu_custom_call.1} parent=1 // pred_check
      _
    $region7: #{tpu_custom_call.1} parent=1 // pred_check_branch
      %12 = sbr.rel (0) target = $region9
    $region8: #{tpu_custom_call.1} parent=1 // pred_region
      _
    $region9: #{tpu_custom_call.1} parent=1 // pred_fallthru
      _
    // Predicated region
    $region10: #{tpu_custom_call.1} parent=1 // pred_check
      _
    $region11: #{tpu_custom_call.1} parent=1 // pred_check_branch
      %14 = sbr.rel (0) target = $region13
    $region12: #{tpu_custom_call.1} parent=1 // pred_region
      _
    $region13: #{tpu_custom_call.1} parent=1 // pred_fallthru
      _
    %v15 = vld [vmem:[%s0] sm:$0x3]
    %v16 = vld [vmem:[%s1] sm:$0xff]
    %v17 = vld [vmem:[%s1 + $0x8] sm:$0xff]
    %v18 = vld [vmem:[%s1 + $0x10] sm:$0xff]
    %v19 = vld [vmem:[%s1 + $0x18] sm:$0xff]
    %v20 = vld [vmem:[%s2] sm:$0x1]
    %v22 = vperm.slane %v20, 0
    %vm24 = vcmask 261120
    %v26 = vsel %vm24, %v15, 0
    %28 = vmatpush.msra.mxu0 0.0
    %29 = vmatpush.msra.mxu0 0.0
    %30 = vmatpush.msra.mxu0 0.0
    %31 = vmatpush.msra.mxu0 0.0
    %32 = vmatpush.msra.mxu0 0.0
    %33 = vmatpush.msra.mxu0 0.0
    %34 = vmatpush.msra.mxu0 0.0
    %35 = vmatpush.msra.mxu0 0.0
    %36 = vmatpush.msra.mxu0 0.0
    %37 = vmatpush.msra.mxu0 0.0
    %38 = vmatpush.msra.mxu0 0.0
    %39 = vmatpush.msra.mxu0 0.0
    %40 = vmatpush.msra.mxu0 %v19
    %41 = vmatpush.msra.mxu0 %v18
    %42 = vmatpush.msra.mxu0 %v17
    %43 = vmatpush.msra.mxu0 %v16
    %44 = vmatmul.f32.gmra.mxu0 %v26
    %v45 = vpop.f32.mrf.mxu0
    %v46 = vadd.f32 %v22, %v45
    %47 = vdwg.mxu0
    %vm48 = vcmask 74752
    %v49 = vsel %vm48, %v46, -inf
    %50 = vmax.xlane.f32.xlu0 %v49
    %v51 = vpop.xlane.xlu0 %50
    %v52 = vsub.f32 %v46, %v51
    %v53 = vmul.f32 %v52, 1.442695
    %v54 = vpow.pop %v53
    %v55 = vsel %vm48, %v54, 0.0
    %56 = vadd.xlane.f32.xlu0 %v55
    %v57 = vpop.xlane.xlu0 %56
    %v58 = vlog2.pop %v57
    %v59 = vmul.f32 %v58, 0.6931472
    %v60 = vsub.f32 %v52, %v59
    %61 = vst.msk [vmem:[#allocation2] sm:$0x3] %vm48, %v60
    // Predicated region
    $region14: #{tpu_custom_call.1} parent=1 // pred_check
      _
    $region15: #{tpu_custom_call.1} parent=1 // pred_check_branch
      %63 = sbr.rel (0) target = $region17
    $region16: #{tpu_custom_call.1} parent=1 // pred_region
      %65 = vsyncadd [#allocation3], 0
      %s67 = sshll.u32 [#allocation2], 4
      %s68 = int_to_ptr.vmem [resolvable:$true] %s67
      %s69 = sshll.u32 %s3, 4
      %s70 = int_to_ptr.hbm [resolvable:$true] %s69
      %72 = dma.vmem_to_hbm [thread:$0]  %s68, 32, %s70, [#allocation3]
    $region17: #{tpu_custom_call.1} parent=1 // pred_fallthru
      _
    // Predicated region
    $region18: #{tpu_custom_call.1} parent=1 // pred_check
      _
    $region19: #{tpu_custom_call.1} parent=1 // pred_check_branch
      %74 = sbr.rel (0) target = $region21
    $region20: #{tpu_custom_call.1} parent=1 // pred_region
      %76 = dma.done [#allocation3], 32
    $region21: #{tpu_custom_call.1} parent=1 // pred_fallthru
      _
    %77 = vsyncpa [#allocation3], 1

</llo_original>
